<compile_context>
chip_gen: v6e
topology: v6e:2x2x1
jax: 0.10.0
libtpu: 0.0.40
codegen_flags: <defaults>
</compile_context>

<pallas_src>
import functools

import jax
import jax.numpy as jnp
from jax.experimental import pallas as pl
from jax.experimental.pallas import tpu as pltpu


def _round_up(x, m):
    return (x + m - 1) // m * m


def _encoder_kernel(p_ref, w_ref, g_ref, b_ref, o_ref, *, eps, true_p):
    # p_ref: (1, K_pad, P_pad) bf16  -- im2col patches of one sample (K on sublanes, spatial on lanes)
    # w_ref: (C_out_pad, K_pad) bf16
    # g_ref, b_ref: (C_out_pad, 1) f32
    # o_ref: (1, C_out_pad, P_pad) f32 -- lane-dense, already channel-major (NCHW-ready)
    y = jnp.dot(w_ref[...], p_ref[0], preferred_element_type=jnp.float32)  # (C_out_pad, P_pad)

    # InstanceNorm2d (biased variance) over the spatial axis in ONE pass over y.
    # Padded spatial columns of y are exactly zero (zero patches), so only the divisor
    # needs the true spatial size.
    inv_p = jnp.float32(1.0 / true_p)
    s = jnp.sum(y, axis=1, keepdims=True)            # (C_out_pad, 1)
    ss = jnp.sum(y * y, axis=1, keepdims=True)       # (C_out_pad, 1)
    mean = s * inv_p
    var = jnp.maximum(ss * inv_p - mean * mean, 0.0)
    inv_std = jax.lax.rsqrt(var + eps)

    scale = inv_std * g_ref[...]                     # (C_out_pad, 1)
    shift = b_ref[...] - mean * scale
    o_ref[0] = jnp.maximum(y * scale + shift, 0.0).astype(o_ref.dtype)


def _im2col_kp(x, kh, kw, stride, padding):
    # x: (N, C_in, H, W) -> (N, K, P) with K ordered (C_in, kh, kw), P = H_out * W_out.
    # TODO(synk): fuse tap extraction into the kernel (kh*kw small matmuls over strided
    # slices of the padded input) to avoid the kh*kw HBM blowup of materialized im2col.
    n, c_in, h, w = x.shape
    x_pad = jnp.pad(x, ((0, 0), (0, 0), (padding, padding), (padding, padding)))
    h_out = (h + 2 * padding - kh) // stride + 1
    w_out = (w + 2 * padding - kw) // stride + 1
    taps = []
    for ki in range(kh):
        for kj in range(kw):
            taps.append(
                x_pad[:, :, ki:ki + stride * h_out:stride, kj:kj + stride * w_out:stride]
            )
    patches = jnp.stack(taps, axis=2)                             # (N, C_in, kh*kw, H_out, W_out)
    patches = patches.reshape(n, c_in * kh * kw, h_out * w_out)   # (N, K, P)
    return patches, h_out, w_out


def encoder_node_forward(x, conv_w, gamma, beta, *, stride, padding, eps=1e-5):
    """x: (N, C_in, H, W); conv_w: (C_out, C_in, kh, kw); returns (N, C_out, H_out, W_out)."""
    n, c_in, _, _ = x.shape
    c_out, _, kh, kw = conv_w.shape

    # bf16 operands for the MXU (accumulation stays f32 in-kernel); im2col done in bf16
    # so the materialized patch tensor carries half the HBM bytes.
    patches, h_out, w_out = _im2col_kp(x.astype(jnp.bfloat16), kh, kw, stride, padding)
    p = h_out * w_out
    k = c_in * kh * kw

    # TPU-friendly zero padding: spatial -> multiple of 128 lanes, K / C_out -> multiple of 8
    # sublanes.  All pads are zeros, so they contribute nothing to the dot or the statistics.
    p_pad = _round_up(p, 128)
    k_pad = _round_up(k, 8)
    c_out_pad = _round_up(c_out, 8)

    patches = jnp.pad(patches, ((0, 0), (0, k_pad - k), (0, p_pad - p)))

    w_mat = conv_w.reshape(c_out, k).astype(jnp.bfloat16)          # K ordered (C_in, kh, kw)
    w_mat = jnp.pad(w_mat, ((0, c_out_pad - c_out), (0, k_pad - k)))

    g = jnp.pad(gamma.astype(jnp.float32), (0, c_out_pad - c_out)).reshape(c_out_pad, 1)
    b = jnp.pad(beta.astype(jnp.float32), (0, c_out_pad - c_out)).reshape(c_out_pad, 1)

    # Per-step VMEM footprint (patch + output blocks are double-buffered by the pipeline).
    block_bytes = (2 * k_pad * p_pad * 2            # bf16 patch block, 2 buffers
                   + 2 * c_out_pad * p_pad * 4      # f32 output block, 2 buffers
                   + c_out_pad * k_pad * 2          # weight
                   + 2 * c_out_pad * 4)             # gamma / beta
    vmem_limit = None
    if block_bytes > 12 * 1024 * 1024:
        # TODO(synk): for very large P on v7x (64 MiB VMEM) tile the P axis with a second
        # grid dim and a two-pass (sum/sumsq then normalize) norm instead of raising this.
        vmem_limit = min(2 * block_bytes + (4 << 20), 48 * 1024 * 1024)

    kernel = functools.partial(_encoder_kernel, eps=eps, true_p=p)
    out_flat = pl.pallas_call(
        kernel,
        out_shape=jax.ShapeDtypeStruct((n, c_out_pad, p_pad), jnp.float32),
        grid_spec=pltpu.PrefetchScalarGridSpec(
            num_scalar_prefetch=0,
            grid=(n,),
            in_specs=[
                pl.BlockSpec((1, k_pad, p_pad), lambda i: (i, 0, 0)),   # patches (per sample)
                pl.BlockSpec((c_out_pad, k_pad), lambda i: (0, 0)),     # weight (resident)
                pl.BlockSpec((c_out_pad, 1), lambda i: (0, 0)),         # gamma
                pl.BlockSpec((c_out_pad, 1), lambda i: (0, 0)),         # beta
            ],
            out_specs=pl.BlockSpec((1, c_out_pad, p_pad), lambda i: (i, 0, 0)),
        ),
        compiler_params=pltpu.CompilerParams(
            dimension_semantics=("parallel",),
            vmem_limit_bytes=vmem_limit,
        ),
    )(patches, w_mat, g, b)

    # Output is already channel-major: just drop the pad and fold P back to (H_out, W_out).
    return out_flat[:, :c_out, :p].reshape(n, c_out, h_out, w_out)


def reference_forward(x, conv_w, gamma, beta, *, stride, padding, eps=1e-5):
    y = jax.lax.conv_general_dilated(
        x.astype(jnp.float32), conv_w.astype(jnp.float32),
        window_strides=(stride, stride),
        padding=[(padding, padding), (padding, padding)],
        dimension_numbers=("NCHW", "OIHW", "NCHW"),
    )
    mean = jnp.mean(y, axis=(2, 3), keepdims=True)
    var = jnp.mean((y - mean) ** 2, axis=(2, 3), keepdims=True)
    y = (y - mean) * jax.lax.rsqrt(var + eps)
    y = y * gamma.reshape(1, -1, 1, 1) + beta.reshape(1, -1, 1, 1)
    return jnp.maximum(y, 0.0)


if __name__ == "__main__":
    # Shapes consistent with the module: batch=2, in_dim=4, out_dim=8, spatial=16,
    # kernel_size=3, stride=2, padding=1  ->  output (2, 8, 8, 8)
    N, C_IN, H, W = 2, 4, 16, 16
    C_OUT, KSIZE, STRIDE, PAD = 8, 3, 2, 1

    key = jax.random.PRNGKey(0)
    kx, kw = jax.random.split(key)
    x = jax.random.normal(kx, (N, C_IN, H, W), dtype=jnp.float32)

    # Deterministic parameter init (synthetic stand-in for kernel_initializer).
    conv_w = 0.05 * jax.random.normal(kw, (C_OUT, C_IN, KSIZE, KSIZE), dtype=jnp.float32)
    gamma = jnp.ones((C_OUT,), jnp.float32)    # InstanceNorm2d affine weight default
    beta = jnp.zeros((C_OUT,), jnp.float32)    # InstanceNorm2d affine bias default

    out = encoder_node_forward(x, conv_w, gamma, beta, stride=STRIDE, padding=PAD)
    out = jax.block_until_ready(out)
    assert out.shape == (N, C_OUT, 8, 8), out.shape

    # Reference computed on the same bf16-quantized operands (the kernel feeds the MXU
    # bf16 inputs with f32 accumulation), so the comparison isolates the kernel math.
    xq = x.astype(jnp.bfloat16).astype(jnp.float32)
    wq = conv_w.astype(jnp.bfloat16).astype(jnp.float32)
    ref = reference_forward(xq, wq, gamma, beta, stride=STRIDE, padding=PAD)
    max_err = float(jnp.max(jnp.abs(out - ref)))
    assert jnp.allclose(out, ref, atol=1e-3, rtol=1e-3), max_err

    print("KERNEL_OK")
</pallas_src>

<mosaic_0001>
module attributes {stable_mosaic.version = 11 : i64} {
  func.func @_encoder_kernel(%arg0: i32, %arg1: memref<1x40x128xbf16, #tpu.memory_space<vmem>>, %arg2: memref<8x40xbf16, #tpu.memory_space<vmem>>, %arg3: memref<8x1xf32, #tpu.memory_space<vmem>>, %arg4: memref<8x1xf32, #tpu.memory_space<vmem>>, %arg5: memref<1x8x128xf32, #tpu.memory_space<vmem>>) attributes {dimension_semantics = [#tpu.dimension_semantics<parallel>], iteration_bounds = array<i64: 2>, scalar_prefetch = 0 : i64, scratch_operands = 0 : i64, tpu.core_type = #tpu.core_type<tc>, window_params = [{transform_indices = @transform_0, window_bounds = array<i64: 1, 40, 128>}, {pipeline_mode = #tpu.pipeline_mode<synchronous>, transform_indices = @transform_1, window_bounds = array<i64: 8, 40>}, {pipeline_mode = #tpu.pipeline_mode<synchronous>, transform_indices = @transform_2, window_bounds = array<i64: 8, 1>}, {pipeline_mode = #tpu.pipeline_mode<synchronous>, transform_indices = @transform_3, window_bounds = array<i64: 8, 1>}, {transform_indices = @transform_4, window_bounds = array<i64: 1, 8, 128>}]} {
    %c0 = arith.constant 0 : index
    %c0_0 = arith.constant 0 : index
    %0 = vector.load %arg2[%c0, %c0_0] : memref<8x40xbf16, #tpu.memory_space<vmem>>, vector<8x40xbf16>
    %c0_1 = arith.constant 0 : index
    %c0_2 = arith.constant 0 : index
    %c0_3 = arith.constant 0 : index
    %1 = vector.load %arg1[%c0_1, %c0_2, %c0_3] : memref<1x40x128xbf16, #tpu.memory_space<vmem>>, vector<1x40x128xbf16>
    %2 = vector.shape_cast %1 : vector<1x40x128xbf16> to vector<40x128xbf16>
    %cst = arith.constant dense<0.000000e+00> : vector<8x128xf32>
    %3 = tpu.matmul %0, %2, %cst {dimension_numbers = #tpu.dot_dimension_numbers<[1], [0], [0], [1], [0, 0, 1, 1], [], []>} : vector<8x40xbf16>, vector<40x128xbf16>, vector<8x128xf32> -> vector<8x128xf32>
    %cst_4 = arith.constant dense<0.000000e+00> : vector<8xf32>
    %4 = vector.multi_reduction <add>, %3, %cst_4 [1] : vector<8x128xf32> to vector<8xf32>
    %5 = vector.shape_cast %4 : vector<8xf32> to vector<8x1xf32>
    %6 = arith.mulf %3, %3 : vector<8x128xf32>
    %cst_5 = arith.constant dense<0.000000e+00> : vector<8xf32>
    %7 = vector.multi_reduction <add>, %6, %cst_5 [1] : vector<8x128xf32> to vector<8xf32>
    %8 = vector.shape_cast %7 : vector<8xf32> to vector<8x1xf32>
    %cst_6 = arith.constant 1.562500e-02 : f32
    %9 = vector.broadcast %cst_6 : f32 to vector<8x1xf32>
    %10 = arith.mulf %5, %9 : vector<8x1xf32>
    %cst_7 = arith.constant 1.562500e-02 : f32
    %11 = vector.broadcast %cst_7 : f32 to vector<8x1xf32>
    %12 = arith.mulf %8, %11 : vector<8x1xf32>
    %13 = arith.mulf %10, %10 : vector<8x1xf32>
    %14 = arith.subf %12, %13 : vector<8x1xf32>
    %cst_8 = arith.constant 0.000000e+00 : f32
    %15 = vector.broadcast %cst_8 : f32 to vector<8x1xf32>
    %16 = arith.maximumf %14, %15 : vector<8x1xf32>
    %cst_9 = arith.constant 9.99999974E-6 : f32
    %17 = vector.broadcast %cst_9 : f32 to vector<8x1xf32>
    %18 = arith.addf %16, %17 : vector<8x1xf32>
    %19 = math.rsqrt %18 : vector<8x1xf32>
    %c0_10 = arith.constant 0 : index
    %c0_11 = arith.constant 0 : index
    %20 = vector.load %arg3[%c0_10, %c0_11] : memref<8x1xf32, #tpu.memory_space<vmem>>, vector<8x1xf32>
    %21 = arith.mulf %19, %20 : vector<8x1xf32>
    %c0_12 = arith.constant 0 : index
    %c0_13 = arith.constant 0 : index
    %22 = vector.load %arg4[%c0_12, %c0_13] : memref<8x1xf32, #tpu.memory_space<vmem>>, vector<8x1xf32>
    %23 = arith.mulf %10, %21 : vector<8x1xf32>
    %24 = arith.subf %22, %23 : vector<8x1xf32>
    %25 = vector.broadcast %21 : vector<8x1xf32> to vector<8x128xf32>
    %26 = arith.mulf %3, %25 : vector<8x128xf32>
    %27 = vector.broadcast %24 : vector<8x1xf32> to vector<8x128xf32>
    %28 = arith.addf %26, %27 : vector<8x128xf32>
    %cst_14 = arith.constant 0.000000e+00 : f32
    %29 = vector.broadcast %cst_14 : f32 to vector<8x128xf32>
    %30 = arith.maximumf %28, %29 : vector<8x128xf32>
    %c0_15 = arith.constant 0 : index
    %c0_16 = arith.constant 0 : index
    %c0_17 = arith.constant 0 : index
    %31 = vector.load %arg5[%c0_15, %c0_16, %c0_17] : memref<1x8x128xf32, #tpu.memory_space<vmem>>, vector<1x8x128xf32>
    %32 = vector.shape_cast %31 : vector<1x8x128xf32> to vector<8x128xf32>
    %33 = vector.shape_cast %30 : vector<8x128xf32> to vector<1x8x128xf32>
    tpu.vector_store %arg5[%c0_15, %c0_16, %c0_17], %33 {strides = array<i32>} : memref<1x8x128xf32, #tpu.memory_space<vmem>>, vector<1x8x128xf32>,
    return
  }
  func.func @transform_0(%arg0: i32) -> (i32, i32, i32) {
    %c0_i32 = arith.constant 0 : i32
    %c0_i32_0 = arith.constant 0 : i32
    %c0_i32_1 = arith.constant 0 : i32
    return %arg0, %c0_i32, %c0_i32_0 : i32, i32, i32
  }
  func.func @transform_1(%arg0: i32) -> (i32, i32) {
    %c0_i32 = arith.constant 0 : i32
    %c0_i32_0 = arith.constant 0 : i32
    %c0_i32_1 = arith.constant 0 : i32
    return %c0_i32, %c0_i32_0 : i32, i32
  }
  func.func @transform_2(%arg0: i32) -> (i32, i32) {
    %c0_i32 = arith.constant 0 : i32
    %c0_i32_0 = arith.constant 0 : i32
    %c0_i32_1 = arith.constant 0 : i32
    return %c0_i32, %c0_i32_0 : i32, i32
  }
  func.func @transform_3(%arg0: i32) -> (i32, i32) {
    %c0_i32 = arith.constant 0 : i32
    %c0_i32_0 = arith.constant 0 : i32
    %c0_i32_1 = arith.constant 0 : i32
    return %c0_i32, %c0_i32_0 : i32, i32
  }
  func.func @transform_4(%arg0: i32) -> (i32, i32, i32) {
    %c0_i32 = arith.constant 0 : i32
    %c0_i32_0 = arith.constant 0 : i32
    %c0_i32_1 = arith.constant 0 : i32
    return %arg0, %c0_i32, %c0_i32_0 : i32, i32, i32
  }
}

</mosaic_0001>

<llo_original>
// kernel: tpu_custom_call.1
$region0: #{tpu_custom_call.1}
  #allocation0 [shape = 'u32[]', space=smem, size = 0x4, offset = 0x4, fixed_abs, tag = 'smem constant byte address 0x4 - core index']
  #allocation1 [shape = 'u32[144,128]{1,0:T(1,128)}', space=vmem, size = 0x12000, scoped, tag = 'internal scratch']
  %s0 = inlined_call_operand.hbm [shape: bf16[2,40,128], index: 0, kind: input, shape index: {}]
  %s1 = inlined_call_operand.vmem [shape: bf16[8,40], index: 1, kind: input, shape index: {}]
  %s2 = inlined_call_operand.vmem [shape: f32[8,1], index: 2, kind: input, shape index: {}]
  %s3 = inlined_call_operand.vmem [shape: f32[8,1], index: 3, kind: input, shape index: {}]
  %s4 = inlined_call_operand.hbm [shape: f32[2,8,128], index: 4, kind: output, shape index: {}]
  %s5 = sld [smem:[#allocation0]]
  $region53: #{tpu_custom_call.1} parent=0
    _
  %s7 = ssub.s32 1, %s5
  %s8 = scalar_select 0, %s7, %s5
  $region1: #{tpu_custom_call.1} parent=0
    #allocation2 [shape = 'u8[20480]{0}', space=vmem, size = 0x5000, scoped, tag = 'input window, operand 0']
    #allocation3 [shape = 's32[2]{0}', space=sflag, size = 0x8, scoped, tag = 'scoped memory for tpu_custom_call.1']
    #allocation4 [shape = 's32[2]{0}', space=sflag, size = 0x8, scoped, tag = 'scoped memory for tpu_custom_call.1']
    #allocation5 [shape = 'u8[8192]{0}', space=vmem, size = 0x2000, scoped, tag = 'output window, operand 0']
    %9 = vsyncpa [#allocation3], 0
    %s10 = scalar_lea.sflag [#allocation3], 1
    %11 = vsyncpa %s10, 0
    %12 = vsyncpa [#allocation4], 0
    %s13 = scalar_lea.sflag [#allocation4], 1
    %14 = vsyncpa %s13, 0
    loop: start=0, step=1, limit=4
    $region2: #{tpu_custom_call.1} parent=1 // loop_pre_header
      _
    $region3: #{tpu_custom_call.1} parent=1 // loop_header
      %s16 = sphi 0, %s20
      %p17 = scmp.ge.s32.totalorder %s16, 4
      %s26 = sphi 0, %s28
      %s29 = sphi 0, %s26
      %s30 = sphi 0, %s29
      %s46 = sphi 0, %s30
      %s50 = sphi 0, %s50
      %s52 = sphi 0, %s50
      %s53 = sphi 0, %s52
      %s67 = sphi 0, %s53
      %s71 = sphi 0, %s71
      %s73 = sphi 0, %s71
      %s74 = sphi 0, %s73
      %s88 = sphi 0, %s74
      %s92 = sphi 0, %s92
      %s94 = sphi 0, %s92
      %s95 = sphi 0, %s94
      %s109 = sphi 0, %s95
      %s115 = sphi 0, %s117
      %s118 = sphi 0, %s115
      %s119 = sphi 0, %s118
      %s135 = sphi 0, %s119
    $region4: #{tpu_custom_call.1} parent=1 // loop_header_branch
      %19 = sbr.rel (%p17) target = $region8
    $region5: #{tpu_custom_call.1} parent=1 // loop_body
      %s21 = ssub.s32 %s16, 1
      %s22 = ssub.s32 %s16, 2
      %s23 = sadd.s32 %s16, 1
      %s24 = ssub.s32 %s16, %s23
      %p25 = scmp.eq.s32.totalorder %s24, 0
      %s27 = sadd.s32 %s26, 1
      %s28 = scalar_select %p25, %s26, %s27
      %p31 = pneg %p25
      %p32 = scmp.eq.s32.totalorder %s16, 1
      %p33 = por %p31, %p32
      %p34 = scmp.ne.s32.totalorder %s26, %s29
      %p35 = scmp.eq.s32.totalorder %s16, 0
      %p36 = por %p34, %p35
      %p37 = scmp.ne.s32.totalorder %s26, %s29
      %p38 = scmp.eq.s32.totalorder %s21, 1
      %p39 = por %p37, %p38
      %p40 = scmp.ne.s32.totalorder %s29, %s30
      %p41 = scmp.eq.s32.totalorder %s21, 0
      %p42 = por %p40, %p41
      %p43 = scmp.ne.s32.totalorder %s29, %s30
      %p44 = scmp.eq.s32.totalorder %s22, 1
      %p45 = por %p43, %p44
      %p47 = scmp.ne.s32.totalorder %s30, %s46
      %p48 = scmp.eq.s32.totalorder %s22, 0
      %p49 = por %p47, %p48
      %s51 = sadd.s32 %s50, 1
      %p54 = scmp.eq.s32.totalorder %s16, 1
      %p55 = scmp.ne.s32.totalorder %s50, %s52
      %p56 = scmp.eq.s32.totalorder %s16, 0
      %p57 = por %p55, %p56
      %p58 = scmp.ne.s32.totalorder %s50, %s52
      %p59 = scmp.eq.s32.totalorder %s21, 1
      %p60 = por %p58, %p59
      %p61 = scmp.ne.s32.totalorder %s52, %s53
      %p62 = scmp.eq.s32.totalorder %s21, 0
      %p63 = por %p61, %p62
      %p64 = scmp.ne.s32.totalorder %s52, %s53
      %p65 = scmp.eq.s32.totalorder %s22, 1
      %p66 = por %p64, %p65
      %p68 = scmp.ne.s32.totalorder %s53, %s67
      %p69 = scmp.eq.s32.totalorder %s22, 0
      %p70 = por %p68, %p69
      %s72 = sadd.s32 %s71, 1
      %p75 = scmp.eq.s32.totalorder %s16, 1
      %p76 = scmp.ne.s32.totalorder %s71, %s73
      %p77 = scmp.eq.s32.totalorder %s16, 0
      %p78 = por %p76, %p77
      %p79 = scmp.ne.s32.totalorder %s71, %s73
      %p80 = scmp.eq.s32.totalorder %s21, 1
      %p81 = por %p79, %p80
      %p82 = scmp.ne.s32.totalorder %s73, %s74
      %p83 = scmp.eq.s32.totalorder %s21, 0
      %p84 = por %p82, %p83
      %p85 = scmp.ne.s32.totalorder %s73, %s74
      %p86 = scmp.eq.s32.totalorder %s22, 1
      %p87 = por %p85, %p86
      %p89 = scmp.ne.s32.totalorder %s74, %s88
      %p90 = scmp.eq.s32.totalorder %s22, 0
      %p91 = por %p89, %p90
      %s93 = sadd.s32 %s92, 1
      %p96 = scmp.eq.s32.totalorder %s16, 1
      %p97 = scmp.ne.s32.totalorder %s92, %s94
      %p98 = scmp.eq.s32.totalorder %s16, 0
      %p99 = por %p97, %p98
      %p100 = scmp.ne.s32.totalorder %s92, %s94
      %p101 = scmp.eq.s32.totalorder %s21, 1
      %p102 = por %p100, %p101
      %p103 = scmp.ne.s32.totalorder %s94, %s95
      %p104 = scmp.eq.s32.totalorder %s21, 0
      %p105 = por %p103, %p104
      %p106 = scmp.ne.s32.totalorder %s94, %s95
      %p107 = scmp.eq.s32.totalorder %s22, 1
      %p108 = por %p106, %p107
      %p110 = scmp.ne.s32.totalorder %s95, %s109
      %p111 = scmp.eq.s32.totalorder %s22, 0
      %p112 = por %p110, %p111
      %s113 = ssub.s32 %s16, %s23
      %p114 = scmp.eq.s32.totalorder %s113, 0
      %s116 = sadd.s32 %s115, 1
      %s117 = scalar_select %p114, %s115, %s116
      %p120 = pneg %p114
      %p121 = scmp.eq.s32.totalorder %s16, 1
      %p122 = por %p120, %p121
      %p123 = scmp.ne.s32.totalorder %s115, %s118
      %p124 = scmp.eq.s32.totalorder %s16, 0
      %p125 = por %p123, %p124
      %p126 = scmp.ne.s32.totalorder %s115, %s118
      %p127 = scmp.eq.s32.totalorder %s21, 1
      %p128 = por %p126, %p127
      %p129 = scmp.ne.s32.totalorder %s118, %s119
      %p130 = scmp.eq.s32.totalorder %s21, 0
      %p131 = por %p129, %p130
      %p132 = scmp.ne.s32.totalorder %s118, %s119
      %p133 = scmp.eq.s32.totalorder %s22, 1
      %p134 = por %p132, %p133
      %p136 = scmp.ne.s32.totalorder %s119, %s135
      %p137 = scmp.eq.s32.totalorder %s22, 0
      %p138 = por %p136, %p137
      %p139 = scmp.le.s32.totalorder 1, %s16
      %p140 = scmp.lt.s32.totalorder %s16, 3
      %p141 = pnand %p139, %p140
      %p142 = pneg %p141
      // Predicated region
      $region9: #{tpu_custom_call.1} parent=5 // pred_check
        _
      $region10: #{tpu_custom_call.1} parent=5 // pred_check_branch
        %144 = sbr.rel (%p141) target = $region12
      $region11: #{tpu_custom_call.1} parent=5 // pred_region
        %s145 = ssub.s32 %s16, 1
        // Predicated region
        $region13: #{tpu_custom_call.1} parent=11 // pred_check
          %p146 = pneg %p63
        $region14: #{tpu_custom_call.1} parent=11 // pred_check_branch
          %148 = sbr.rel (%p146) target = $region16
        $region15: #{tpu_custom_call.1} parent=11 // pred_region
          _
        $region16: #{tpu_custom_call.1} parent=11 // pred_fallthru
          _
        // Predicated region
        $region17: #{tpu_custom_call.1} parent=11 // pred_check
          %p149 = pneg %p84
        $region18: #{tpu_custom_call.1} parent=11 // pred_check_branch
          %151 = sbr.rel (%p149) target = $region20
        $region19: #{tpu_custom_call.1} parent=11 // pred_region
          _
        $region20: #{tpu_custom_call.1} parent=11 // pred_fallthru
          _
        // Predicated region
        $region21: #{tpu_custom_call.1} parent=11 // pred_check
          %p152 = pneg %p105
        $region22: #{tpu_custom_call.1} parent=11 // pred_check_branch
          %154 = sbr.rel (%p152) target = $region24
        $region23: #{tpu_custom_call.1} parent=11 // pred_region
          _
        $region24: #{tpu_custom_call.1} parent=11 // pred_fallthru
          _
      $region12: #{tpu_custom_call.1} parent=5 // pred_fallthru
        _
      %p155 = scmp.lt.s32.totalorder %s16, 2
      // Predicated region
      $region25: #{tpu_custom_call.1} parent=5 // pred_check
        %p156 = pneg %p155
      $region26: #{tpu_custom_call.1} parent=5 // pred_check_branch
        %158 = sbr.rel (%p156) target = $region28
      $region27: #{tpu_custom_call.1} parent=5 // pred_region
        // Predicated region
        $region29: #{tpu_custom_call.1} parent=27 // pred_check
          %p159 = pneg %p36
        $region30: #{tpu_custom_call.1} parent=27 // pred_check_branch
          %161 = sbr.rel (%p159) target = $region32
        $region31: #{tpu_custom_call.1} parent=27 // pred_region
          %s162 = sand.u32 %s26, 1
          %s163 = scalar_lea.sflag [#allocation3], %s162
          %s164 = sand.u32 %s26, 1
          %s165 = smul.addr %s164, 20
          %s166 = scalar_lea.vmem [#allocation2], %s165
          %s168 = ssub.s32 320, 320
          %169 = vsyncadd %s163, %s168
          %s170 = smul.addr %s16, 5
          %s171 = smul.addr %s170, 64
          %s172 = scalar_lea.hbm %s0, %s171
          %s173 = sshll.u32 %s166, 4
          %s174 = int_to_ptr.vmem [resolvable:$true] %s173
          %179 = dma.hbm_to_vmem [thread:$0]  %s172, 320, %s174, %s163, 64, 64, 4
        $region32: #{tpu_custom_call.1} parent=27 // pred_fallthru
          _
      $region28: #{tpu_custom_call.1} parent=5 // pred_fallthru
        _
      %p180 = scmp.le.s32.totalorder 1, %s16
      %p181 = scmp.lt.s32.totalorder %s16, 3
      %p182 = pnand %p180, %p181
      %p183 = pneg %p182
      // Predicated region
      $region33: #{tpu_custom_call.1} parent=5 // pred_check
        _
      $region34: #{tpu_custom_call.1} parent=5 // pred_check_branch
        %185 = sbr.rel (%p182) target = $region36
      $region35: #{tpu_custom_call.1} parent=5 // pred_region
        %s186 = ssub.s32 %s16, 1
        %s187 = sand.u32 %s29, 1
        %s188 = scalar_lea.sflag [#allocation3], %s187
        %s189 = sand.u32 %s29, 1
        %s190 = smul.addr %s189, 20
        %s191 = scalar_lea.vmem [#allocation2], %s190
        // Predicated region
        $region37: #{tpu_custom_call.1} parent=35 // pred_check
          %p192 = pneg %p42
        $region38: #{tpu_custom_call.1} parent=35 // pred_check_branch
          %194 = sbr.rel (%p192) target = $region40
        $region39: #{tpu_custom_call.1} parent=35 // pred_region
          %195 = dma.done %s188, 320
        $region40: #{tpu_custom_call.1} parent=35 // pred_fallthru
          _
        %s196 = sand.u32 %s29, 1
        %s197 = scalar_lea.sflag [#allocation3], %s196
        %s198 = sand.u32 %s29, 1
        %s199 = smul.addr %s198, 20
        %s200 = scalar_lea.vmem [#allocation2], %s199
        %p201 = pneg %p42
        %p202 = pneg %p39
        %p203 = pneg %p63
        %p204 = pneg %p60
        %p205 = pneg %p84
        %p206 = pneg %p81
        %p207 = pneg %p105
        %p208 = pneg %p102
        %p209 = pneg %p131
        %p210 = pneg %p128
        %s211 = sand.u32 %s118, 1
        %s212 = scalar_lea.sflag [#allocation4], %s211
        %s213 = sand.u32 %s118, 1
        %s214 = smul.addr %s213, 8
        %s215 = scalar_lea.vmem [#allocation5], %s214
        %v217 = vld [vmem:[%s1] sm:$0xf]
        %v218 = vld [vmem:[%s191] sm:$0xf]
        %v219 = vld [vmem:[%s191 + $0x4] sm:$0xf]
        %v220 = vld [vmem:[%s191 + $0x8] sm:$0xf]
        %v221 = vld [vmem:[%s191 + $0xc] sm:$0xf]
        %v222 = vld [vmem:[%s191 + $0x10] sm:$0xf]
        %v228 = vunpack.c.l.b16 %v218
        %v229 = vunpack.c.l.b16 %v219
        %v230 = vunpack.c.l.b16 %v220
        %v231 = vunpack.c.l.b16 %v221
        %v232 = vunpack.c.l.b16 %v222
        %v233 = vpack.c.b16 %v229, %v228
        %v234 = vpack.c.b16 %v231, %v230
        %v235 = vpack.c.b16 %v232, %v232
        %vm238 = vcmask 326656
        %v240 = vsel %vm238, %v217, 0
        %vm242 = vcmask 1043456
        %v244 = vsel %vm242, %v235, 0
        %246 = vmatprep.subr.bf16.mxu0 0
        %247 = vmatpush1.bf16.msra.mxu0 0
        %248 = vmatprep.subr.bf16.mxu0 0
        %249 = vmatpush1.bf16.msra.mxu0 0
        %250 = vmatprep.subr.bf16.mxu0 0
        %251 = vmatpush1.bf16.msra.mxu0 0
        %252 = vmatprep.subr.bf16.mxu0 0
        %253 = vmatpush1.bf16.msra.mxu0 0
        %254 = vmatprep.subr.bf16.mxu0 0
        %255 = vmatpush1.bf16.msra.mxu0 0
        %256 = vmatprep.subr.bf16.mxu0 0
        %257 = vmatpush1.bf16.msra.mxu0 %v244
        %258 = vmatprep.subr.bf16.mxu0 0
        %259 = vmatpush1.bf16.msra.mxu0 %v234
        %260 = vmatprep.subr.bf16.mxu0 0
        %261 = vmatpush1.bf16.msra.mxu0 %v233
        %262 = vmatprep.subr.bf16.mxu0 0
        %263 = vmatpush2.bf16.msra.mxu0 0
        %264 = vmatprep.subr.bf16.mxu0 0
        %265 = vmatpush2.bf16.msra.mxu0 0
        %266 = vmatprep.subr.bf16.mxu0 0
        %267 = vmatpush2.bf16.msra.mxu0 0
        %268 = vmatprep.subr.bf16.mxu0 0
        %269 = vmatpush2.bf16.msra.mxu0 0
        %270 = vmatprep.subr.bf16.mxu0 0
        %271 = vmatpush2.bf16.msra.mxu0 0
        %272 = vmatprep.subr.bf16.mxu0 0
        %273 = vmatpush2.bf16.msra.mxu0 0
        %274 = vmatprep.subr.bf16.mxu0 0
        %275 = vmatpush2.bf16.msra.mxu0 0
        %276 = vmatprep.subr.bf16.mxu0 0
        %277 = vmatpush2.bf16.msra.mxu0 0
        %278 = vmatprep.mubr.bf16.mxu0 0
        %279 = vmatmul.mubr.bf16.gmra.mxu0 %v240
        %v280 = vpop.f32.mrf.mxu0
        %v281 = vadd.f32 0.0, %v280
        %v282 = vpop.f32.mrf.mxu0
        %v283 = vpop.f32.mrf.mxu0
        %v284 = vpop.f32.mrf.mxu0
        %285 = vdwg.mxu0
        %286 = vadd.xlane.f32.xlu0 %v281
        %v287 = vpop.xlane.xlu0 %286
        %v288 = vmul.f32 %v281, %v281
        %289 = vadd.xlane.f32.xlu0 %v288
        %v290 = vpop.xlane.xlu0 %289
        %v291 = vmul.f32 %v287, 0.015625
        %v292 = vmul.f32 %v290, 0.015625
        %v293 = vmul.f32 %v291, %v291
        %v294 = vsub.f32 %v292, %v293
        %v295 = vmax.f32 %v294, 0.0
        %v296 = vadd.f32 %v295, 1e-05
        %v297 = vrsqrt.pop %v296
        %v298 = vld [vmem:[%s2] sm:$0xff]
        %v299 = vmul.f32 %v297, %v298
        %v300 = vld [vmem:[%s3] sm:$0xff]
        %v301 = vmul.f32 %v291, %v299
        %v302 = vsub.f32 %v300, %v301
        %304 = vset.pattern.permute.xlu0 0
        %305 = vperm.xlu0 %304, %v299
        %v306 = vpop.permute.xlu0 %305
        %v308 = vmul.f32 %v281, %v306
        %310 = vset.pattern.permute.xlu0 0
        %311 = vperm.xlu0 %310, %v302
        %v312 = vpop.permute.xlu0 %311
        %v314 = vadd.f32 %v308, %v312
        %v315 = vmax.f32 %v314, 0.0
        %316 = vst [vmem:[%s215] sm:$0xff] %v315
        %s317 = sand.u32 %s118, 1
        %s318 = scalar_lea.sflag [#allocation4], %s317
        %s319 = sand.u32 %s118, 1
        %s320 = smul.addr %s319, 8
        %s321 = scalar_lea.vmem [#allocation5], %s320
        // Predicated region
        $region41: #{tpu_custom_call.1} parent=35 // pred_check
          %p322 = pneg %p128
        $region42: #{tpu_custom_call.1} parent=35 // pred_check_branch
          %324 = sbr.rel (%p322) target = $region44
        $region43: #{tpu_custom_call.1} parent=35 // pred_region
          %s326 = ssub.s32 128, 128
          %327 = vsyncadd %s318, %s326
          %s328 = smul.addr %s21, 128
          %s329 = scalar_lea.hbm %s4, %s328
          %s331 = sshll.u32 %s321, 4
          %s332 = int_to_ptr.vmem [resolvable:$true] %s331
          %334 = dma.vmem_to_hbm [thread:$0]  %s332, 128, %s329, %s318
        $region44: #{tpu_custom_call.1} parent=35 // pred_fallthru
          _
      $region36: #{tpu_custom_call.1} parent=5 // pred_fallthru
        _
      %p335 = scmp.le.s32.totalorder 2, %s16
      // Predicated region
      $region45: #{tpu_custom_call.1} parent=5 // pred_check
        %p336 = pneg %p335
      $region46: #{tpu_custom_call.1} parent=5 // pred_check_branch
        %338 = sbr.rel (%p336) target = $region48
      $region47: #{tpu_custom_call.1} parent=5 // pred_region
        %s339 = ssub.s32 %s16, 2
        // Predicated region
        $region49: #{tpu_custom_call.1} parent=47 // pred_check
          %p340 = pneg %p134
        $region50: #{tpu_custom_call.1} parent=47 // pred_check_branch
          %342 = sbr.rel (%p340) target = $region52
        $region51: #{tpu_custom_call.1} parent=47 // pred_region
          %s343 = sand.u32 %s119, 1
          %s344 = scalar_lea.sflag [#allocation4], %s343
          %s345 = sand.u32 %s119, 1
          %s346 = smul.addr %s345, 8
          %s347 = scalar_lea.vmem [#allocation5], %s346
          %348 = dma.done %s344, 128
        $region52: #{tpu_custom_call.1} parent=47 // pred_fallthru
          _
      $region48: #{tpu_custom_call.1} parent=5 // pred_fallthru
        _
    $region6: #{tpu_custom_call.1} parent=1 // loop_footer
      %s20 = sadd.s32 1, %s16
    $region7: #{tpu_custom_call.1} parent=1 // loop_footer_branch
      %15 = sbr.rel target = $region3
    $region8: #{tpu_custom_call.1} parent=1 // loop_exit
      _
    %349 = vsyncpa [#allocation3], 1
    %s350 = scalar_lea.sflag [#allocation3], 1
    %351 = vsyncpa %s350, 1
    %352 = vsyncpa [#allocation4], 1
    %s353 = scalar_lea.sflag [#allocation4], 1
    %354 = vsyncpa %s353, 1

</llo_original>
